<compile_context>
chip_gen: v5e
topology: v5e:2x2
jax: 0.10.0
libtpu: 0.0.40
codegen_flags: <defaults>
</compile_context>

<pallas_src>
import functools

import jax
import jax.numpy as jnp
from jax.experimental import pallas as pl
from jax.experimental.pallas import tpu as pltpu

DROP_P = 0.5
DROP_SCALE = 1.0 / (1.0 - DROP_P)


def _mish(x):
    # mish(x) = x * tanh(softplus(x)) = x * n / (n + 2),  n = e^x * (e^x + 2).
    # One EUP exp + one divide instead of exp + log1p + tanh.
    e = jnp.exp(jnp.minimum(x, 20.0))       # clamp: mish(x) ~= x for x > 20
    n = e * (e + 2.0)
    return x * n / (n + 2.0)


def _keep_mask(shape, seed, layer_id, row_offset):
    # Stateless P(keep)=0.5 mask: splitmix32-ish hash of the *global* element
    # index + seed + layer id.  Pure jnp integer ops (VPU only) -> portable.
    rows = jax.lax.broadcasted_iota(jnp.int32, shape, 0) + row_offset
    cols = jax.lax.broadcasted_iota(jnp.int32, shape, 1)
    z = (rows * jnp.int32(shape[1]) + cols).astype(jnp.uint32)
    z = z + seed.astype(jnp.uint32) * jnp.uint32(0x9E3779B9)
    z = z + jnp.uint32(layer_id) * jnp.uint32(0x85EBCA6B)
    z = (z ^ (z >> 16)) * jnp.uint32(0x7FEB352D)
    z = (z ^ (z >> 15)) * jnp.uint32(0x846CA68B)
    z = z ^ (z >> 16)
    return (z & jnp.uint32(1)) == jnp.uint32(0)


def _dropout(x, seed, layer_id, row_offset):
    keep = _keep_mask(x.shape, seed, layer_id, row_offset)
    return jnp.where(keep, x * DROP_SCALE, 0.0)


def _d_net_gauss_kernel(seed_ref,
                        x_ref, w1_ref, b1_ref, w2_ref, b2_ref, w3_ref, b3_ref,
                        out_ref, *, tile_b, z_dim, training):
    seed = seed_ref[0]
    row0 = pl.program_id(0) * tile_b          # unique dropout mask per tile

    x = x_ref[...].astype(jnp.float32)        # (tile_b, z_dim)

    # ---- lin1: K == z_dim (tiny) -> VPU outer product, skip the MXU ---------
    w1 = w1_ref[...]
    h = x[:, 0:1] * w1[0:1, :]
    for k in range(1, z_dim):
        h = h + x[:, k:k + 1] * w1[k:k + 1, :]
    h = h + b1_ref[...]
    if training:
        h = _dropout(h, seed, 1, row0)
    h = _mish(h)

    # ---- lin2: N x N -> the one real matmul (bf16 in, f32 accumulate) -------
    h = jnp.dot(h.astype(jnp.bfloat16), w2_ref[...],
                preferred_element_type=jnp.float32) + b2_ref[...]
    if training:
        h = _dropout(h, seed, 2, row0)
    h = _mish(h)

    # ---- lin3: N_out == 1 -> VPU multiply + lane reduce, skip the MXU -------
    out = jnp.sum(h * w3_ref[...], axis=-1, keepdims=True) + b3_ref[...]
    out_ref[...] = out.astype(out_ref.dtype)


def _round_up(n, m):
    return ((n + m - 1) // m) * m


def d_net_gauss_forward(x, params, seed, *, tile_b=128, training=True):
    """x: (B, z_dim) float32.  Returns (B, 1) float32."""
    w1, b1, w2, b2, w3, b3 = params
    B, z_dim = x.shape
    N = w1.shape[1]

    # TILE_B: multiple of 8 (f32 sublane).  At tile_b=128, N=128 the resident
    # weights (~50 KiB) + two (tile_b, N) f32 activations (~128 KiB) are far
    # under every generation's VMEM budget (incl. v7x's 64 MiB).
    tile_b = max(8, min(_round_up(tile_b, 8), _round_up(B, 8)))
    b_pad = _round_up(B, tile_b)
    if b_pad != B:
        x = jnp.pad(x, ((0, b_pad - B), (0, 0)))
    grid = (b_pad // tile_b,)

    const = lambda i, seed_ref: (0, 0)        # weights stay resident in VMEM

    kernel = functools.partial(_d_net_gauss_kernel,
                               tile_b=tile_b, z_dim=z_dim, training=training)

    flops = 2 * b_pad * (z_dim * N + N * N + N) + 10 * b_pad * N
    bytes_accessed = int(x.size * 4 + w1.size * 4 + b1.size * 4 + w2.size * 2 +
                         b2.size * 4 + w3.size * 4 + b3.size * 4 + b_pad * 4)

    out = pl.pallas_call(
        kernel,
        out_shape=jax.ShapeDtypeStruct((b_pad, 1), jnp.float32),
        grid_spec=pltpu.PrefetchScalarGridSpec(
            num_scalar_prefetch=1,            # seed lives in SMEM
            grid=grid,
            in_specs=[
                pl.BlockSpec((tile_b, z_dim), lambda i, seed_ref: (i, 0)),  # x
                pl.BlockSpec((z_dim, N), const),   # w1 (in, out)
                pl.BlockSpec((1, N), const),       # b1
                pl.BlockSpec((N, N), const),       # w2 (bf16)
                pl.BlockSpec((1, N), const),       # b2
                pl.BlockSpec((1, N), const),       # w3 as a row vector
                pl.BlockSpec((1, 1), const),       # b3
            ],
            out_specs=pl.BlockSpec((tile_b, 1), lambda i, seed_ref: (i, 0)),
        ),
        compiler_params=pltpu.CompilerParams(
            dimension_semantics=("parallel",),     # megacore split on v7x
        ),
        cost_estimate=pl.CostEstimate(
            flops=flops,
            transcendentals=2 * b_pad * N,         # one exp per hidden element
            bytes_accessed=bytes_accessed),
    )(seed, x, w1, b1, w2, b2, w3, b3)

    return out[:B]


def init_params(key, z_dim=2, N=128):
    """PyTorch-like nn.Linear init (uniform +-1/sqrt(fan_in)).
    Weights stored pre-transposed as (in_features, out_features)."""
    ks = jax.random.split(key, 6)

    def lin(kw, kb, fan_in, fan_out):
        bound = 1.0 / float(fan_in) ** 0.5
        w = jax.random.uniform(kw, (fan_in, fan_out), jnp.float32, -bound, bound)
        b = jax.random.uniform(kb, (1, fan_out), jnp.float32, -bound, bound)
        return w, b

    w1, b1 = lin(ks[0], ks[1], z_dim, N)
    w2, b2 = lin(ks[2], ks[3], N, N)
    w3, b3 = lin(ks[4], ks[5], N, 1)
    w2 = w2.astype(jnp.bfloat16)      # MXU-native dtype for the only real matmul
    w3 = w3.reshape(1, N)             # row vector for the in-kernel lane reduce
    b3 = b3.reshape(1, 1)
    return (w1, b1, w2, b2, w3, b3)


def _reference_eval(x, params):
    """Pure-JAX reference of the eval path (no dropout) for a sanity check."""
    w1, b1, w2, b2, w3, b3 = params

    def mish(v):
        return v * jnp.tanh(jnp.logaddexp(v, 0.0))

    h = mish(x @ w1 + b1)
    h = mish(h.astype(jnp.bfloat16).astype(jnp.float32)
             @ w2.astype(jnp.float32) + b2)
    return jnp.sum(h * w3, axis=-1, keepdims=True) + b3


if __name__ == "__main__":
    # Small shapes consistent with the module: z_dim=2 (module default),
    # N=128 (scaled-down hidden width, lane-aligned), batch=256 so the batch
    # grid actually has 2 tiles of 128.
    Z_DIM, N, BATCH, TILE_B = 2, 128, 256, 128

    key = jax.random.PRNGKey(0)
    k_x, k_p = jax.random.split(key)

    x = jax.random.normal(k_x, (BATCH, Z_DIM), dtype=jnp.float32)
    params = init_params(k_p, z_dim=Z_DIM, N=N)
    seed = jnp.array([0], dtype=jnp.int32)

    # Eval path (dropout off) checked against a pure-JAX reference.
    out_eval = d_net_gauss_forward(x, params, seed, tile_b=TILE_B,
                                   training=False)
    out_eval = jax.block_until_ready(out_eval)
    ref = _reference_eval(x, params)
    assert out_eval.shape == (BATCH, 1), out_eval.shape
    assert jnp.allclose(out_eval, ref, atol=1e-2, rtol=1e-2), (
        float(jnp.max(jnp.abs(out_eval - ref))))

    # Training path (dropout on), as in the PyTorch module's forward.
    out = d_net_gauss_forward(x, params, seed, tile_b=TILE_B, training=True)
    out = jax.block_until_ready(out)

    assert out.shape == (BATCH, 1), out.shape
    assert out.dtype == jnp.float32, out.dtype
    assert bool(jnp.all(jnp.isfinite(out)))
    print("KERNEL_OK")
</pallas_src>

<mosaic_0001>
module attributes {stable_mosaic.version = 11 : i64} {
  func.func @_d_net_gauss_kernel(%arg0: i32, %arg1: memref<1xi32, #tpu.memory_space<smem>>, %arg2: memref<128x2xf32, #tpu.memory_space<vmem>>, %arg3: memref<2x128xf32, #tpu.memory_space<vmem>>, %arg4: memref<1x128xf32, #tpu.memory_space<vmem>>, %arg5: memref<128x128xbf16, #tpu.memory_space<vmem>>, %arg6: memref<1x128xf32, #tpu.memory_space<vmem>>, %arg7: memref<1x128xf32, #tpu.memory_space<vmem>>, %arg8: memref<1x1xf32, #tpu.memory_space<vmem>>, %arg9: memref<128x1xf32, #tpu.memory_space<vmem>>) attributes {dimension_semantics = [#tpu.dimension_semantics<parallel>], iteration_bounds = array<i64: 2>, scalar_prefetch = 1 : i64, scratch_operands = 0 : i64, tpu.core_type = #tpu.core_type<tc>, window_params = [{transform_indices = @transform_0, window_bounds = array<i64: 128, 2>}, {pipeline_mode = #tpu.pipeline_mode<synchronous>, transform_indices = @transform_1, window_bounds = array<i64: 2, 128>}, {pipeline_mode = #tpu.pipeline_mode<synchronous>, transform_indices = @transform_2, window_bounds = array<i64: 1, 128>}, {pipeline_mode = #tpu.pipeline_mode<synchronous>, transform_indices = @transform_3, window_bounds = array<i64: 128, 128>}, {pipeline_mode = #tpu.pipeline_mode<synchronous>, transform_indices = @transform_4, window_bounds = array<i64: 1, 128>}, {pipeline_mode = #tpu.pipeline_mode<synchronous>, transform_indices = @transform_5, window_bounds = array<i64: 1, 128>}, {pipeline_mode = #tpu.pipeline_mode<synchronous>, transform_indices = @transform_6, window_bounds = array<i64: 1, 1>}, {transform_indices = @transform_7, window_bounds = array<i64: 128, 1>}]} {
    %c0 = arith.constant 0 : index
    %c0_0 = arith.constant 0 : index
    %0 = vector.load %arg2[%c0, %c0_0] : memref<128x2xf32, #tpu.memory_space<vmem>>, vector<128x2xf32>
    %c0_1 = arith.constant 0 : index
    %c0_2 = arith.constant 0 : index
    %1 = vector.load %arg3[%c0_1, %c0_2] : memref<2x128xf32, #tpu.memory_space<vmem>>, vector<2x128xf32>
    %2 = vector.extract_strided_slice %0 {offsets = [0, 0], sizes = [128, 1], strides = [1, 1]} : vector<128x2xf32> to vector<128x1xf32>
    %3 = vector.extract_strided_slice %1 {offsets = [0, 0], sizes = [1, 128], strides = [1, 1]} : vector<2x128xf32> to vector<1x128xf32>
    %4 = vector.broadcast %2 : vector<128x1xf32> to vector<128x128xf32>
    %5 = vector.broadcast %3 : vector<1x128xf32> to vector<128x128xf32>
    %6 = arith.mulf %4, %5 : vector<128x128xf32>
    %7 = vector.extract_strided_slice %0 {offsets = [0, 1], sizes = [128, 1], strides = [1, 1]} : vector<128x2xf32> to vector<128x1xf32>
    %8 = vector.extract_strided_slice %1 {offsets = [1, 0], sizes = [1, 128], strides = [1, 1]} : vector<2x128xf32> to vector<1x128xf32>
    %9 = vector.broadcast %7 : vector<128x1xf32> to vector<128x128xf32>
    %10 = vector.broadcast %8 : vector<1x128xf32> to vector<128x128xf32>
    %11 = arith.mulf %9, %10 : vector<128x128xf32>
    %12 = arith.addf %6, %11 : vector<128x128xf32>
    %c0_3 = arith.constant 0 : index
    %c0_4 = arith.constant 0 : index
    %13 = vector.load %arg4[%c0_3, %c0_4] : memref<1x128xf32, #tpu.memory_space<vmem>>, vector<1x128xf32>
    %14 = vector.broadcast %13 : vector<1x128xf32> to vector<128x128xf32>
    %15 = arith.addf %12, %14 : vector<128x128xf32>
    %cst = arith.constant 2.000000e+01 : f32
    %16 = vector.broadcast %cst : f32 to vector<128x128xf32>
    %17 = arith.minimumf %15, %16 : vector<128x128xf32>
    %18 = math.exp %17 : vector<128x128xf32>
    %cst_5 = arith.constant 2.000000e+00 : f32
    %19 = vector.broadcast %cst_5 : f32 to vector<128x128xf32>
    %20 = arith.addf %18, %19 : vector<128x128xf32>
    %21 = arith.mulf %18, %20 : vector<128x128xf32>
    %22 = arith.mulf %15, %21 : vector<128x128xf32>
    %cst_6 = arith.constant 2.000000e+00 : f32
    %23 = vector.broadcast %cst_6 : f32 to vector<128x128xf32>
    %24 = arith.addf %21, %23 : vector<128x128xf32>
    %25 = arith.divf %22, %24 : vector<128x128xf32>
    %26 = arith.truncf %25 : vector<128x128xf32> to vector<128x128xbf16>
    %c0_7 = arith.constant 0 : index
    %c0_8 = arith.constant 0 : index
    %27 = vector.load %arg5[%c0_7, %c0_8] : memref<128x128xbf16, #tpu.memory_space<vmem>>, vector<128x128xbf16>
    %cst_9 = arith.constant dense<0.000000e+00> : vector<128x128xf32>
    %28 = tpu.matmul %26, %27, %cst_9 {dimension_numbers = #tpu.dot_dimension_numbers<[1], [0], [0], [1], [0, 0, 1, 1], [], []>} : vector<128x128xbf16>, vector<128x128xbf16>, vector<128x128xf32> -> vector<128x128xf32>
    %c0_10 = arith.constant 0 : index
    %c0_11 = arith.constant 0 : index
    %29 = vector.load %arg6[%c0_10, %c0_11] : memref<1x128xf32, #tpu.memory_space<vmem>>, vector<1x128xf32>
    %30 = vector.broadcast %29 : vector<1x128xf32> to vector<128x128xf32>
    %31 = arith.addf %28, %30 : vector<128x128xf32>
    %cst_12 = arith.constant 2.000000e+01 : f32
    %32 = vector.broadcast %cst_12 : f32 to vector<128x128xf32>
    %33 = arith.minimumf %31, %32 : vector<128x128xf32>
    %34 = math.exp %33 : vector<128x128xf32>
    %cst_13 = arith.constant 2.000000e+00 : f32
    %35 = vector.broadcast %cst_13 : f32 to vector<128x128xf32>
    %36 = arith.addf %34, %35 : vector<128x128xf32>
    %37 = arith.mulf %34, %36 : vector<128x128xf32>
    %38 = arith.mulf %31, %37 : vector<128x128xf32>
    %cst_14 = arith.constant 2.000000e+00 : f32
    %39 = vector.broadcast %cst_14 : f32 to vector<128x128xf32>
    %40 = arith.addf %37, %39 : vector<128x128xf32>
    %41 = arith.divf %38, %40 : vector<128x128xf32>
    %c0_15 = arith.constant 0 : index
    %c0_16 = arith.constant 0 : index
    %42 = vector.load %arg7[%c0_15, %c0_16] : memref<1x128xf32, #tpu.memory_space<vmem>>, vector<1x128xf32>
    %43 = vector.broadcast %42 : vector<1x128xf32> to vector<128x128xf32>
    %44 = arith.mulf %41, %43 : vector<128x128xf32>
    %cst_17 = arith.constant dense<0.000000e+00> : vector<128xf32>
    %45 = vector.multi_reduction <add>, %44, %cst_17 [1] : vector<128x128xf32> to vector<128xf32>
    %46 = vector.shape_cast %45 : vector<128xf32> to vector<128x1xf32>
    %c0_18 = arith.constant 0 : index
    %c0_19 = arith.constant 0 : index
    %47 = vector.load %arg8[%c0_18, %c0_19] : memref<1x1xf32, #tpu.memory_space<vmem>>, vector<1x1xf32>
    %48 = vector.broadcast %47 : vector<1x1xf32> to vector<128x1xf32>
    %49 = arith.addf %46, %48 : vector<128x1xf32>
    %c0_20 = arith.constant 0 : index
    %c0_21 = arith.constant 0 : index
    %50 = vector.load %arg9[%c0_20, %c0_21] : memref<128x1xf32, #tpu.memory_space<vmem>>, vector<128x1xf32>
    tpu.vector_store %arg9[%c0_20, %c0_21], %49 {strides = array<i32>} : memref<128x1xf32, #tpu.memory_space<vmem>>, vector<128x1xf32>,
    return
  }
  func.func @transform_0(%arg0: i32, %arg1: memref<1xi32, #tpu.memory_space<smem>>) -> (i32, i32) {
    %c0_i32 = arith.constant 0 : i32
    %c0_i32_0 = arith.constant 0 : i32
    return %arg0, %c0_i32 : i32, i32
  }
  func.func @transform_1(%arg0: i32, %arg1: memref<1xi32, #tpu.memory_space<smem>>) -> (i32, i32) {
    %c0_i32 = arith.constant 0 : i32
    %c0_i32_0 = arith.constant 0 : i32
    %c0_i32_1 = arith.constant 0 : i32
    return %c0_i32, %c0_i32_0 : i32, i32
  }
  func.func @transform_2(%arg0: i32, %arg1: memref<1xi32, #tpu.memory_space<smem>>) -> (i32, i32) {
    %c0_i32 = arith.constant 0 : i32
    %c0_i32_0 = arith.constant 0 : i32
    %c0_i32_1 = arith.constant 0 : i32
    return %c0_i32, %c0_i32_0 : i32, i32
  }
  func.func @transform_3(%arg0: i32, %arg1: memref<1xi32, #tpu.memory_space<smem>>) -> (i32, i32) {
    %c0_i32 = arith.constant 0 : i32
    %c0_i32_0 = arith.constant 0 : i32
    %c0_i32_1 = arith.constant 0 : i32
    return %c0_i32, %c0_i32_0 : i32, i32
  }
  func.func @transform_4(%arg0: i32, %arg1: memref<1xi32, #tpu.memory_space<smem>>) -> (i32, i32) {
    %c0_i32 = arith.constant 0 : i32
    %c0_i32_0 = arith.constant 0 : i32
    %c0_i32_1 = arith.constant 0 : i32
    return %c0_i32, %c0_i32_0 : i32, i32
  }
  func.func @transform_5(%arg0: i32, %arg1: memref<1xi32, #tpu.memory_space<smem>>) -> (i32, i32) {
    %c0_i32 = arith.constant 0 : i32
    %c0_i32_0 = arith.constant 0 : i32
    %c0_i32_1 = arith.constant 0 : i32
    return %c0_i32, %c0_i32_0 : i32, i32
  }
  func.func @transform_6(%arg0: i32, %arg1: memref<1xi32, #tpu.memory_space<smem>>) -> (i32, i32) {
    %c0_i32 = arith.constant 0 : i32
    %c0_i32_0 = arith.constant 0 : i32
    %c0_i32_1 = arith.constant 0 : i32
    return %c0_i32, %c0_i32_0 : i32, i32
  }
  func.func @transform_7(%arg0: i32, %arg1: memref<1xi32, #tpu.memory_space<smem>>) -> (i32, i32) {
    %c0_i32 = arith.constant 0 : i32
    %c0_i32_0 = arith.constant 0 : i32
    return %arg0, %c0_i32 : i32, i32
  }
}

</mosaic_0001>

<llo_original>
// kernel: tpu_custom_call.1
$region0: #{tpu_custom_call.1}
  #allocation0 [shape = 'u32[]', space=smem, size = 0x4, offset = 0x4, fixed_abs, tag = 'smem constant byte address 0x4 - core index']
  #allocation1 [shape = 'u32[72,128]{1,0:T(1,128)}', space=vmem, size = 0x9000, scoped, tag = 'internal scratch']
  #allocation2 [shape = 's32[1]{0}', space=sflag, size = 0x4, scoped, tag = 'scoped memory for tpu_custom_call.1']
  #allocation3 [shape = 's32[1]{0:T(128)S(6)}', space=smem, size = 0x200, scoped, tag = 'prefetched SMEM operand 0']
  #allocation4 [shape = 'f32[1,1]{1,0:T(1,128)S(1)}', space=vmem, size = 0x200, scoped, tag = 'scoped memory for tpu_custom_call.1']
  %s0 = inlined_call_operand.<no memory space> [shape: s32[1], index: 0, kind: input, shape index: {}]
  %s1 = inlined_call_operand.vmem [shape: f32[256,2], index: 1, kind: input, shape index: {}]
  %s2 = inlined_call_operand.vmem [shape: f32[2,128], index: 2, kind: input, shape index: {}]
  %s3 = inlined_call_operand.vmem [shape: f32[1,128], index: 3, kind: input, shape index: {}]
  %s4 = inlined_call_operand.vmem [shape: bf16[128,128], index: 4, kind: input, shape index: {}]
  %s5 = inlined_call_operand.vmem [shape: f32[1,128], index: 5, kind: input, shape index: {}]
  %s6 = inlined_call_operand.vmem [shape: f32[1,128], index: 6, kind: input, shape index: {}]
  %s7 = inlined_call_operand.<no memory space> [shape: f32[1,1], index: 7, kind: input, shape index: {}]
  %s8 = inlined_call_operand.vmem [shape: f32[256,1], index: 8, kind: output, shape index: {}]
  %s9 = sld [smem:[#allocation0]]
  $region61: #{tpu_custom_call.1} parent=0
    _
  %s11 = ssub.s32 1, %s9
  %s12 = scalar_select 0, %s11, %s9
  %13 = sst [smem:[#allocation3]] %s0
  %v14 = vstv %s7
  %15 = vst [vmem:[#allocation4] sm:$0x1] %v14
  loop: start=0, step=1, limit=4
  $region2: #{tpu_custom_call.1} parent=0 // loop_pre_header
    _
  $region3: #{tpu_custom_call.1} parent=0 // loop_header
    %s17 = sphi 0, %s21
    %p18 = scmp.ge.s32.totalorder %s17, 4
    %s27 = sphi 0, %s29
    %s30 = sphi 0, %s27
    %s31 = sphi 0, %s30
    %s47 = sphi 0, %s31
    %s51 = sphi 0, %s51
    %s53 = sphi 0, %s51
    %s54 = sphi 0, %s53
    %s68 = sphi 0, %s54
    %s72 = sphi 0, %s72
    %s74 = sphi 0, %s72
    %s75 = sphi 0, %s74
    %s89 = sphi 0, %s75
    %s93 = sphi 0, %s93
    %s95 = sphi 0, %s93
    %s96 = sphi 0, %s95
    %s110 = sphi 0, %s96
    %s114 = sphi 0, %s114
    %s116 = sphi 0, %s114
    %s117 = sphi 0, %s116
    %s131 = sphi 0, %s117
    %s135 = sphi 0, %s135
    %s137 = sphi 0, %s135
    %s138 = sphi 0, %s137
    %s152 = sphi 0, %s138
    %s156 = sphi 0, %s156
    %s158 = sphi 0, %s156
    %s159 = sphi 0, %s158
    %s173 = sphi 0, %s159
    %s179 = sphi 0, %s181
    %s182 = sphi 0, %s179
    %s183 = sphi 0, %s182
    %s199 = sphi 0, %s183
  $region4: #{tpu_custom_call.1} parent=0 // loop_header_branch
    %20 = sbr.rel (%p18) target = $region8
  $region5: #{tpu_custom_call.1} parent=0 // loop_body
    %s22 = ssub.s32 %s17, 1
    %s23 = ssub.s32 %s17, 2
    %s24 = sadd.s32 %s17, 1
    %s25 = ssub.s32 %s17, %s24
    %p26 = scmp.eq.s32.totalorder %s25, 0
    %s28 = sadd.s32 %s27, 1
    %s29 = scalar_select %p26, %s27, %s28
    %p32 = pneg %p26
    %p33 = scmp.eq.s32.totalorder %s17, 1
    %p34 = por %p32, %p33
    %p35 = scmp.ne.s32.totalorder %s27, %s30
    %p36 = scmp.eq.s32.totalorder %s17, 0
    %p37 = por %p35, %p36
    %p38 = scmp.ne.s32.totalorder %s27, %s30
    %p39 = scmp.eq.s32.totalorder %s22, 1
    %p40 = por %p38, %p39
    %p41 = scmp.ne.s32.totalorder %s30, %s31
    %p42 = scmp.eq.s32.totalorder %s22, 0
    %p43 = por %p41, %p42
    %p44 = scmp.ne.s32.totalorder %s30, %s31
    %p45 = scmp.eq.s32.totalorder %s23, 1
    %p46 = por %p44, %p45
    %p48 = scmp.ne.s32.totalorder %s31, %s47
    %p49 = scmp.eq.s32.totalorder %s23, 0
    %p50 = por %p48, %p49
    %s52 = sadd.s32 %s51, 1
    %p55 = scmp.eq.s32.totalorder %s17, 1
    %p56 = scmp.ne.s32.totalorder %s51, %s53
    %p57 = scmp.eq.s32.totalorder %s17, 0
    %p58 = por %p56, %p57
    %p59 = scmp.ne.s32.totalorder %s51, %s53
    %p60 = scmp.eq.s32.totalorder %s22, 1
    %p61 = por %p59, %p60
    %p62 = scmp.ne.s32.totalorder %s53, %s54
    %p63 = scmp.eq.s32.totalorder %s22, 0
    %p64 = por %p62, %p63
    %p65 = scmp.ne.s32.totalorder %s53, %s54
    %p66 = scmp.eq.s32.totalorder %s23, 1
    %p67 = por %p65, %p66
    %p69 = scmp.ne.s32.totalorder %s54, %s68
    %p70 = scmp.eq.s32.totalorder %s23, 0
    %p71 = por %p69, %p70
    %s73 = sadd.s32 %s72, 1
    %p76 = scmp.eq.s32.totalorder %s17, 1
    %p77 = scmp.ne.s32.totalorder %s72, %s74
    %p78 = scmp.eq.s32.totalorder %s17, 0
    %p79 = por %p77, %p78
    %p80 = scmp.ne.s32.totalorder %s72, %s74
    %p81 = scmp.eq.s32.totalorder %s22, 1
    %p82 = por %p80, %p81
    %p83 = scmp.ne.s32.totalorder %s74, %s75
    %p84 = scmp.eq.s32.totalorder %s22, 0
    %p85 = por %p83, %p84
    %p86 = scmp.ne.s32.totalorder %s74, %s75
    %p87 = scmp.eq.s32.totalorder %s23, 1
    %p88 = por %p86, %p87
    %p90 = scmp.ne.s32.totalorder %s75, %s89
    %p91 = scmp.eq.s32.totalorder %s23, 0
    %p92 = por %p90, %p91
    %s94 = sadd.s32 %s93, 1
    %p97 = scmp.eq.s32.totalorder %s17, 1
    %p98 = scmp.ne.s32.totalorder %s93, %s95
    %p99 = scmp.eq.s32.totalorder %s17, 0
    %p100 = por %p98, %p99
    %p101 = scmp.ne.s32.totalorder %s93, %s95
    %p102 = scmp.eq.s32.totalorder %s22, 1
    %p103 = por %p101, %p102
    %p104 = scmp.ne.s32.totalorder %s95, %s96
    %p105 = scmp.eq.s32.totalorder %s22, 0
    %p106 = por %p104, %p105
    %p107 = scmp.ne.s32.totalorder %s95, %s96
    %p108 = scmp.eq.s32.totalorder %s23, 1
    %p109 = por %p107, %p108
    %p111 = scmp.ne.s32.totalorder %s96, %s110
    %p112 = scmp.eq.s32.totalorder %s23, 0
    %p113 = por %p111, %p112
    %s115 = sadd.s32 %s114, 1
    %p118 = scmp.eq.s32.totalorder %s17, 1
    %p119 = scmp.ne.s32.totalorder %s114, %s116
    %p120 = scmp.eq.s32.totalorder %s17, 0
    %p121 = por %p119, %p120
    %p122 = scmp.ne.s32.totalorder %s114, %s116
    %p123 = scmp.eq.s32.totalorder %s22, 1
    %p124 = por %p122, %p123
    %p125 = scmp.ne.s32.totalorder %s116, %s117
    %p126 = scmp.eq.s32.totalorder %s22, 0
    %p127 = por %p125, %p126
    %p128 = scmp.ne.s32.totalorder %s116, %s117
    %p129 = scmp.eq.s32.totalorder %s23, 1
    %p130 = por %p128, %p129
    %p132 = scmp.ne.s32.totalorder %s117, %s131
    %p133 = scmp.eq.s32.totalorder %s23, 0
    %p134 = por %p132, %p133
    %s136 = sadd.s32 %s135, 1
    %p139 = scmp.eq.s32.totalorder %s17, 1
    %p140 = scmp.ne.s32.totalorder %s135, %s137
    %p141 = scmp.eq.s32.totalorder %s17, 0
    %p142 = por %p140, %p141
    %p143 = scmp.ne.s32.totalorder %s135, %s137
    %p144 = scmp.eq.s32.totalorder %s22, 1
    %p145 = por %p143, %p144
    %p146 = scmp.ne.s32.totalorder %s137, %s138
    %p147 = scmp.eq.s32.totalorder %s22, 0
    %p148 = por %p146, %p147
    %p149 = scmp.ne.s32.totalorder %s137, %s138
    %p150 = scmp.eq.s32.totalorder %s23, 1
    %p151 = por %p149, %p150
    %p153 = scmp.ne.s32.totalorder %s138, %s152
    %p154 = scmp.eq.s32.totalorder %s23, 0
    %p155 = por %p153, %p154
    %s157 = sadd.s32 %s156, 1
    %p160 = scmp.eq.s32.totalorder %s17, 1
    %p161 = scmp.ne.s32.totalorder %s156, %s158
    %p162 = scmp.eq.s32.totalorder %s17, 0
    %p163 = por %p161, %p162
    %p164 = scmp.ne.s32.totalorder %s156, %s158
    %p165 = scmp.eq.s32.totalorder %s22, 1
    %p166 = por %p164, %p165
    %p167 = scmp.ne.s32.totalorder %s158, %s159
    %p168 = scmp.eq.s32.totalorder %s22, 0
    %p169 = por %p167, %p168
    %p170 = scmp.ne.s32.totalorder %s158, %s159
    %p171 = scmp.eq.s32.totalorder %s23, 1
    %p172 = por %p170, %p171
    %p174 = scmp.ne.s32.totalorder %s159, %s173
    %p175 = scmp.eq.s32.totalorder %s23, 0
    %p176 = por %p174, %p175
    %s177 = ssub.s32 %s17, %s24
    %p178 = scmp.eq.s32.totalorder %s177, 0
    %s180 = sadd.s32 %s179, 1
    %s181 = scalar_select %p178, %s179, %s180
    %p184 = pneg %p178
    %p185 = scmp.eq.s32.totalorder %s17, 1
    %p186 = por %p184, %p185
    %p187 = scmp.ne.s32.totalorder %s179, %s182
    %p188 = scmp.eq.s32.totalorder %s17, 0
    %p189 = por %p187, %p188
    %p190 = scmp.ne.s32.totalorder %s179, %s182
    %p191 = scmp.eq.s32.totalorder %s22, 1
    %p192 = por %p190, %p191
    %p193 = scmp.ne.s32.totalorder %s182, %s183
    %p194 = scmp.eq.s32.totalorder %s22, 0
    %p195 = por %p193, %p194
    %p196 = scmp.ne.s32.totalorder %s182, %s183
    %p197 = scmp.eq.s32.totalorder %s23, 1
    %p198 = por %p196, %p197
    %p200 = scmp.ne.s32.totalorder %s183, %s199
    %p201 = scmp.eq.s32.totalorder %s23, 0
    %p202 = por %p200, %p201
    %p203 = scmp.le.s32.totalorder 1, %s17
    %p204 = scmp.lt.s32.totalorder %s17, 3
    %p205 = pnand %p203, %p204
    %p206 = pneg %p205
    // Predicated region
    $region9: #{tpu_custom_call.1} parent=5 // pred_check
      _
    $region10: #{tpu_custom_call.1} parent=5 // pred_check_branch
      %208 = sbr.rel (%p205) target = $region12
    $region11: #{tpu_custom_call.1} parent=5 // pred_region
      %s209 = ssub.s32 %s17, 1
      // Predicated region
      $region13: #{tpu_custom_call.1} parent=11 // pred_check
        %p210 = pneg %p64
      $region14: #{tpu_custom_call.1} parent=11 // pred_check_branch
        %212 = sbr.rel (%p210) target = $region16
      $region15: #{tpu_custom_call.1} parent=11 // pred_region
        _
      $region16: #{tpu_custom_call.1} parent=11 // pred_fallthru
        _
      // Predicated region
      $region17: #{tpu_custom_call.1} parent=11 // pred_check
        %p213 = pneg %p85
      $region18: #{tpu_custom_call.1} parent=11 // pred_check_branch
        %215 = sbr.rel (%p213) target = $region20
      $region19: #{tpu_custom_call.1} parent=11 // pred_region
        _
      $region20: #{tpu_custom_call.1} parent=11 // pred_fallthru
        _
      // Predicated region
      $region21: #{tpu_custom_call.1} parent=11 // pred_check
        %p216 = pneg %p106
      $region22: #{tpu_custom_call.1} parent=11 // pred_check_branch
        %218 = sbr.rel (%p216) target = $region24
      $region23: #{tpu_custom_call.1} parent=11 // pred_region
        _
      $region24: #{tpu_custom_call.1} parent=11 // pred_fallthru
        _
      // Predicated region
      $region25: #{tpu_custom_call.1} parent=11 // pred_check
        %p219 = pneg %p127
      $region26: #{tpu_custom_call.1} parent=11 // pred_check_branch
        %221 = sbr.rel (%p219) target = $region28
      $region27: #{tpu_custom_call.1} parent=11 // pred_region
        _
      $region28: #{tpu_custom_call.1} parent=11 // pred_fallthru
        _
      // Predicated region
      $region29: #{tpu_custom_call.1} parent=11 // pred_check
        %p222 = pneg %p148
      $region30: #{tpu_custom_call.1} parent=11 // pred_check_branch
        %224 = sbr.rel (%p222) target = $region32
      $region31: #{tpu_custom_call.1} parent=11 // pred_region
        _
      $region32: #{tpu_custom_call.1} parent=11 // pred_fallthru
        _
      // Predicated region
      $region33: #{tpu_custom_call.1} parent=11 // pred_check
        %p225 = pneg %p169
      $region34: #{tpu_custom_call.1} parent=11 // pred_check_branch
        %227 = sbr.rel (%p225) target = $region36
      $region35: #{tpu_custom_call.1} parent=11 // pred_region
        _
      $region36: #{tpu_custom_call.1} parent=11 // pred_fallthru
        _
    $region12: #{tpu_custom_call.1} parent=5 // pred_fallthru
      _
    %p228 = scmp.lt.s32.totalorder %s17, 2
    // Predicated region
    $region37: #{tpu_custom_call.1} parent=5 // pred_check
      %p229 = pneg %p228
    $region38: #{tpu_custom_call.1} parent=5 // pred_check_branch
      %231 = sbr.rel (%p229) target = $region40
    $region39: #{tpu_custom_call.1} parent=5 // pred_region
      // Predicated region
      $region41: #{tpu_custom_call.1} parent=39 // pred_check
        %p232 = pneg %p37
      $region42: #{tpu_custom_call.1} parent=39 // pred_check_branch
        %234 = sbr.rel (%p232) target = $region44
      $region43: #{tpu_custom_call.1} parent=39 // pred_region
        %s235 = smul.u32 16, %s17
        %p236 = scmp.lt.s32.totalorder %s235, 31
        %s237 = scalar_select %p236, %s235, 31
        %s238 = smul.addr %s237, 8
        %s239 = scalar_lea.vmem %s1, %s238
        %s240 = smul.u32 16, %s17
      $region44: #{tpu_custom_call.1} parent=39 // pred_fallthru
        _
    $region40: #{tpu_custom_call.1} parent=5 // pred_fallthru
      _
    %p241 = scmp.le.s32.totalorder 1, %s17
    %p242 = scmp.lt.s32.totalorder %s17, 3
    %p243 = pnand %p241, %p242
    %p244 = pneg %p243
    // Predicated region
    $region45: #{tpu_custom_call.1} parent=5 // pred_check
      _
    $region46: #{tpu_custom_call.1} parent=5 // pred_check_branch
      %246 = sbr.rel (%p243) target = $region48
    $region47: #{tpu_custom_call.1} parent=5 // pred_region
      %s247 = ssub.s32 %s17, 1
      %s248 = smul.u32 16, %s22
      %p249 = scmp.lt.s32.totalorder %s248, 31
      %s250 = scalar_select %p249, %s248, 31
      %s251 = smul.addr %s250, 8
      %s252 = scalar_lea.vmem %s1, %s251
      %p253 = pneg %p43
      %p254 = pneg %p40
      %p255 = pneg %p64
      %p256 = pneg %p61
      %p257 = pneg %p85
      %p258 = pneg %p82
      %p259 = pneg %p106
      %p260 = pneg %p103
      %p261 = pneg %p127
      %p262 = pneg %p124
      %p263 = pneg %p148
      %p264 = pneg %p145
      %p265 = pneg %p169
      %p266 = pneg %p166
      %p267 = pneg %p195
      %p268 = pneg %p192
      %s269 = smul.u32 16, %s22
      %p270 = scmp.lt.s32.totalorder %s269, 31
      %s271 = scalar_select %p270, %s269, 31
      %s272 = smul.addr %s271, 8
      %s273 = scalar_lea.vmem %s8, %s272
      %s274 = smul.u32 16, %s22
      %p275 = scmp.lt.s32.totalorder %s274, 31
      %s276 = scalar_select %p275, %s274, 31
      %s277 = smul.addr %s276, 8
      %s278 = scalar_lea.vmem %s1, %s277
      %s279 = smul.u32 16, %s22
      %s280 = smul.u32 16, %s22
      %p281 = scmp.lt.s32.totalorder %s280, 31
      %s282 = scalar_select %p281, %s280, 31
      %s283 = smul.addr %s282, 8
      %s284 = scalar_lea.vmem %s8, %s283
      %s285 = smul.u32 16, %s22
      %v286 = vld [vmem:[%s278] sm:$0xff]
      %v287 = vld [vmem:[%s278 + $0x8] sm:$0xff]
      %v288 = vld [vmem:[%s278 + $0x10] sm:$0xff]
      %v289 = vld [vmem:[%s278 + $0x18] sm:$0xff]
      %v290 = vld [vmem:[%s278 + $0x20] sm:$0xff]
      %v291 = vld [vmem:[%s278 + $0x28] sm:$0xff]
      %v292 = vld [vmem:[%s278 + $0x30] sm:$0xff]
      %v293 = vld [vmem:[%s278 + $0x38] sm:$0xff]
      %v294 = vld [vmem:[%s278 + $0x40] sm:$0xff]
      %v295 = vld [vmem:[%s278 + $0x48] sm:$0xff]
      %v296 = vld [vmem:[%s278 + $0x50] sm:$0xff]
      %v297 = vld [vmem:[%s278 + $0x58] sm:$0xff]
      %v298 = vld [vmem:[%s278 + $0x60] sm:$0xff]
      %v299 = vld [vmem:[%s278 + $0x68] sm:$0xff]
      %v300 = vld [vmem:[%s278 + $0x70] sm:$0xff]
      %v301 = vld [vmem:[%s278 + $0x78] sm:$0xff]
      %v302 = vld [vmem:[%s2] sm:$0x3]
      %304 = vset.pattern.permute.xlu0 0
      %305 = vperm.xlu0 %304, %v286
      %v306 = vpop.permute.xlu0 %305
      %309 = vset.pattern.permute.xlu0 0
      %310 = vperm.xlu0 %309, %v287
      %v311 = vpop.permute.xlu0 %310
      %314 = vset.pattern.permute.xlu0 0
      %315 = vperm.xlu0 %314, %v288
      %v316 = vpop.permute.xlu0 %315
      %319 = vset.pattern.permute.xlu0 0
      %320 = vperm.xlu0 %319, %v289
      %v321 = vpop.permute.xlu0 %320
      %324 = vset.pattern.permute.xlu0 0
      %325 = vperm.xlu0 %324, %v290
      %v326 = vpop.permute.xlu0 %325
      %329 = vset.pattern.permute.xlu0 0
      %330 = vperm.xlu0 %329, %v291
      %v331 = vpop.permute.xlu0 %330
      %334 = vset.pattern.permute.xlu0 0
      %335 = vperm.xlu0 %334, %v292
      %v336 = vpop.permute.xlu0 %335
      %339 = vset.pattern.permute.xlu0 0
      %340 = vperm.xlu0 %339, %v293
      %v341 = vpop.permute.xlu0 %340
      %344 = vset.pattern.permute.xlu0 0
      %345 = vperm.xlu0 %344, %v294
      %v346 = vpop.permute.xlu0 %345
      %349 = vset.pattern.permute.xlu0 0
      %350 = vperm.xlu0 %349, %v295
      %v351 = vpop.permute.xlu0 %350
      %354 = vset.pattern.permute.xlu0 0
      %355 = vperm.xlu0 %354, %v296
      %v356 = vpop.permute.xlu0 %355
      %359 = vset.pattern.permute.xlu0 0
      %360 = vperm.xlu0 %359, %v297
      %v361 = vpop.permute.xlu0 %360
      %364 = vset.pattern.permute.xlu0 0
      %365 = vperm.xlu0 %364, %v298
      %v366 = vpop.permute.xlu0 %365
      %369 = vset.pattern.permute.xlu0 0
      %370 = vperm.xlu0 %369, %v299
      %v371 = vpop.permute.xlu0 %370
      %374 = vset.pattern.permute.xlu0 0
      %375 = vperm.xlu0 %374, %v300
      %v376 = vpop.permute.xlu0 %375
      %379 = vset.pattern.permute.xlu0 0
      %380 = vperm.xlu0 %379, %v301
      %v381 = vpop.permute.xlu0 %380
      %v383 = vperm.slane %v302, 0
      %v384 = vmul.f32 %v306, %v383
      %v385 = vmul.f32 %v311, %v383
      %v386 = vmul.f32 %v316, %v383
      %v387 = vmul.f32 %v321, %v383
      %v388 = vmul.f32 %v326, %v383
      %v389 = vmul.f32 %v331, %v383
      %v390 = vmul.f32 %v336, %v383
      %v391 = vmul.f32 %v341, %v383
      %v392 = vmul.f32 %v346, %v383
      %v393 = vmul.f32 %v351, %v383
      %v394 = vmul.f32 %v356, %v383
      %v395 = vmul.f32 %v361, %v383
      %v396 = vmul.f32 %v366, %v383
      %v397 = vmul.f32 %v371, %v383
      %v398 = vmul.f32 %v376, %v383
      %v399 = vmul.f32 %v381, %v383
      %400 = vset.pattern.permute.xlu0 1
      %401 = vperm.xlu0 %400, %v286
      %v402 = vpop.permute.xlu0 %401
      %404 = vset.pattern.permute.xlu0 1
      %405 = vperm.xlu0 %404, %v287
      %v406 = vpop.permute.xlu0 %405
      %408 = vset.pattern.permute.xlu0 1
      %409 = vperm.xlu0 %408, %v288
      %v410 = vpop.permute.xlu0 %409
      %412 = vset.pattern.permute.xlu0 1
      %413 = vperm.xlu0 %412, %v289
      %v414 = vpop.permute.xlu0 %413
      %416 = vset.pattern.permute.xlu0 1
      %417 = vperm.xlu0 %416, %v290
      %v418 = vpop.permute.xlu0 %417
      %420 = vset.pattern.permute.xlu0 1
      %421 = vperm.xlu0 %420, %v291
      %v422 = vpop.permute.xlu0 %421
      %424 = vset.pattern.permute.xlu0 1
      %425 = vperm.xlu0 %424, %v292
      %v426 = vpop.permute.xlu0 %425
      %428 = vset.pattern.permute.xlu0 1
      %429 = vperm.xlu0 %428, %v293
      %v430 = vpop.permute.xlu0 %429
      %432 = vset.pattern.permute.xlu0 1
      %433 = vperm.xlu0 %432, %v294
      %v434 = vpop.permute.xlu0 %433
      %436 = vset.pattern.permute.xlu0 1
      %437 = vperm.xlu0 %436, %v295
      %v438 = vpop.permute.xlu0 %437
      %440 = vset.pattern.permute.xlu0 1
      %441 = vperm.xlu0 %440, %v296
      %v442 = vpop.permute.xlu0 %441
      %444 = vset.pattern.permute.xlu0 1
      %445 = vperm.xlu0 %444, %v297
      %v446 = vpop.permute.xlu0 %445
      %448 = vset.pattern.permute.xlu0 1
      %449 = vperm.xlu0 %448, %v298
      %v450 = vpop.permute.xlu0 %449
      %452 = vset.pattern.permute.xlu0 1
      %453 = vperm.xlu0 %452, %v299
      %v454 = vpop.permute.xlu0 %453
      %456 = vset.pattern.permute.xlu0 1
      %457 = vperm.xlu0 %456, %v300
      %v458 = vpop.permute.xlu0 %457
      %460 = vset.pattern.permute.xlu0 1
      %461 = vperm.xlu0 %460, %v301
      %v462 = vpop.permute.xlu0 %461
      %v464 = vperm.slane %v302, 1
      %v465 = vmul.f32 %v402, %v464
      %v466 = vmul.f32 %v406, %v464
      %v467 = vmul.f32 %v410, %v464
      %v468 = vmul.f32 %v414, %v464
      %v469 = vmul.f32 %v418, %v464
      %v470 = vmul.f32 %v422, %v464
      %v471 = vmul.f32 %v426, %v464
      %v472 = vmul.f32 %v430, %v464
      %v473 = vmul.f32 %v434, %v464
      %v474 = vmul.f32 %v438, %v464
      %v475 = vmul.f32 %v442, %v464
      %v476 = vmul.f32 %v446, %v464
      %v477 = vmul.f32 %v450, %v464
      %v478 = vmul.f32 %v454, %v464
      %v479 = vmul.f32 %v458, %v464
      %v480 = vmul.f32 %v462, %v464
      %v481 = vadd.f32 %v384, %v465
      %v482 = vadd.f32 %v385, %v466
      %v483 = vadd.f32 %v386, %v467
      %v484 = vadd.f32 %v387, %v468
      %v485 = vadd.f32 %v388, %v469
      %v486 = vadd.f32 %v389, %v470
      %v487 = vadd.f32 %v390, %v471
      %v488 = vadd.f32 %v391, %v472
      %v489 = vadd.f32 %v392, %v473
      %v490 = vadd.f32 %v393, %v474
      %v491 = vadd.f32 %v394, %v475
      %v492 = vadd.f32 %v395, %v476
      %v493 = vadd.f32 %v396, %v477
      %v494 = vadd.f32 %v397, %v478
      %v495 = vadd.f32 %v398, %v479
      %v496 = vadd.f32 %v399, %v480
      %v497 = vld [vmem:[%s3] sm:$0x1]
      %v499 = vperm.slane %v497, 0
      %v501 = vadd.f32 %v481, %v499
      %v502 = vadd.f32 %v482, %v499
      %v503 = vadd.f32 %v483, %v499
      %v504 = vadd.f32 %v484, %v499
      %v505 = vadd.f32 %v485, %v499
      %v506 = vadd.f32 %v486, %v499
      %v507 = vadd.f32 %v487, %v499
      %v508 = vadd.f32 %v488, %v499
      %v509 = vadd.f32 %v489, %v499
      %v510 = vadd.f32 %v490, %v499
      %v511 = vadd.f32 %v491, %v499
      %v512 = vadd.f32 %v492, %v499
      %v513 = vadd.f32 %v493, %v499
      %v514 = vadd.f32 %v494, %v499
      %v515 = vadd.f32 %v495, %v499
      %v516 = vadd.f32 %v496, %v499
      %v517 = vmin.f32 %v501, 20.0
      %v518 = vmin.f32 %v502, 20.0
      %v519 = vmin.f32 %v503, 20.0
      %v520 = vmin.f32 %v504, 20.0
      %v521 = vmin.f32 %v505, 20.0
      %v522 = vmin.f32 %v506, 20.0
      %v523 = vmin.f32 %v507, 20.0
      %v524 = vmin.f32 %v508, 20.0
      %v525 = vmin.f32 %v509, 20.0
      %v526 = vmin.f32 %v510, 20.0
      %v527 = vmin.f32 %v511, 20.0
      %v528 = vmin.f32 %v512, 20.0
      %v529 = vmin.f32 %v513, 20.0
      %v530 = vmin.f32 %v514, 20.0
      %v531 = vmin.f32 %v515, 20.0
      %v532 = vmin.f32 %v516, 20.0
      %v533 = vmul.f32 %v517, 1.442695
      %v534 = vpow.pop %v533
      %v535 = vmul.f32 %v518, 1.442695
      %v536 = vpow.pop %v535
      %v537 = vmul.f32 %v519, 1.442695
      %v538 = vpow.pop %v537
      %v539 = vmul.f32 %v520, 1.442695
      %v540 = vpow.pop %v539
      %v541 = vmul.f32 %v521, 1.442695
      %v542 = vpow.pop %v541
      %v543 = vmul.f32 %v522, 1.442695
      %v544 = vpow.pop %v543
      %v545 = vmul.f32 %v523, 1.442695
      %v546 = vpow.pop %v545
      %v547 = vmul.f32 %v524, 1.442695
      %v548 = vpow.pop %v547
      %v549 = vmul.f32 %v525, 1.442695
      %v550 = vpow.pop %v549
      %v551 = vmul.f32 %v526, 1.442695
      %v552 = vpow.pop %v551
      %v553 = vmul.f32 %v527, 1.442695
      %v554 = vpow.pop %v553
      %v555 = vmul.f32 %v528, 1.442695
      %v556 = vpow.pop %v555
      %v557 = vmul.f32 %v529, 1.442695
      %v558 = vpow.pop %v557
      %v559 = vmul.f32 %v530, 1.442695
      %v560 = vpow.pop %v559
      %v561 = vmul.f32 %v531, 1.442695
      %v562 = vpow.pop %v561
      %v563 = vmul.f32 %v532, 1.442695
      %v564 = vpow.pop %v563
      %v565 = vadd.f32 %v534, 2.0
      %v566 = vadd.f32 %v536, 2.0
      %v567 = vadd.f32 %v538, 2.0
      %v568 = vadd.f32 %v540, 2.0
      %v569 = vadd.f32 %v542, 2.0
      %v570 = vadd.f32 %v544, 2.0
      %v571 = vadd.f32 %v546, 2.0
      %v572 = vadd.f32 %v548, 2.0
      %v573 = vadd.f32 %v550, 2.0
      %v574 = vadd.f32 %v552, 2.0
      %v575 = vadd.f32 %v554, 2.0
      %v576 = vadd.f32 %v556, 2.0
      %v577 = vadd.f32 %v558, 2.0
      %v578 = vadd.f32 %v560, 2.0
      %v579 = vadd.f32 %v562, 2.0
      %v580 = vadd.f32 %v564, 2.0
      %v581 = vmul.f32 %v534, %v565
      %v582 = vmul.f32 %v536, %v566
      %v583 = vmul.f32 %v538, %v567
      %v584 = vmul.f32 %v540, %v568
      %v585 = vmul.f32 %v542, %v569
      %v586 = vmul.f32 %v544, %v570
      %v587 = vmul.f32 %v546, %v571
      %v588 = vmul.f32 %v548, %v572
      %v589 = vmul.f32 %v550, %v573
      %v590 = vmul.f32 %v552, %v574
      %v591 = vmul.f32 %v554, %v575
      %v592 = vmul.f32 %v556, %v576
      %v593 = vmul.f32 %v558, %v577
      %v594 = vmul.f32 %v560, %v578
      %v595 = vmul.f32 %v562, %v579
      %v596 = vmul.f32 %v564, %v580
      %v597 = vmul.f32 %v501, %v581
      %v598 = vmul.f32 %v502, %v582
      %v599 = vmul.f32 %v503, %v583
      %v600 = vmul.f32 %v504, %v584
      %v601 = vmul.f32 %v505, %v585
      %v602 = vmul.f32 %v506, %v586
      %v603 = vmul.f32 %v507, %v587
      %v604 = vmul.f32 %v508, %v588
      %v605 = vmul.f32 %v509, %v589
      %v606 = vmul.f32 %v510, %v590
      %v607 = vmul.f32 %v511, %v591
      %v608 = vmul.f32 %v512, %v592
      %v609 = vmul.f32 %v513, %v593
      %v610 = vmul.f32 %v514, %v594
      %v611 = vmul.f32 %v515, %v595
      %v612 = vmul.f32 %v516, %v596
      %v613 = vadd.f32 %v581, 2.0
      %v614 = vadd.f32 %v582, 2.0
      %v615 = vadd.f32 %v583, 2.0
      %v616 = vadd.f32 %v584, 2.0
      %v617 = vadd.f32 %v585, 2.0
      %v618 = vadd.f32 %v586, 2.0
      %v619 = vadd.f32 %v587, 2.0
      %v620 = vadd.f32 %v588, 2.0
      %v621 = vadd.f32 %v589, 2.0
      %v622 = vadd.f32 %v590, 2.0
      %v623 = vadd.f32 %v591, 2.0
      %v624 = vadd.f32 %v592, 2.0
      %v625 = vadd.f32 %v593, 2.0
      %v626 = vadd.f32 %v594, 2.0
      %v627 = vadd.f32 %v595, 2.0
      %v628 = vadd.f32 %v596, 2.0
      %v629 = vrcp.pop %v613
      %v630 = vmul.f32 %v613, %v629
      %v631 = vsub.f32 1.0, %v630
      %v632 = vmul.f32 %v629, %v631
      %v633 = vadd.f32 %v629, %v632
      %vm634 = vweird.f32 %v613
      %vm635 = vweird.f32 %v629
      %vm636 = vmor %vm634, %vm635
      %v637 = vsel %vm636, %v629, %v633
      %v638 = vand.u32 2147483647, %v613
      %vm639 = vcmp.eq.f32.partialorder %v638, 8.507059e+37
      %v640 = vand.u32 %v613, 2147483648
      %v641 = vor.u32 1.1754944e-38, %v640
      %v642 = vsel %vm639, %v641, %v637
      %v643 = vmul.f32 %v597, %v642
      %v644 = vrcp.pop %v614
      %v645 = vmul.f32 %v614, %v644
      %v646 = vsub.f32 1.0, %v645
      %v647 = vmul.f32 %v644, %v646
      %v648 = vadd.f32 %v644, %v647
      %vm649 = vweird.f32 %v614
      %vm650 = vweird.f32 %v644
      %vm651 = vmor %vm649, %vm650
      %v652 = vsel %vm651, %v644, %v648
      %v653 = vand.u32 2147483647, %v614
      %vm654 = vcmp.eq.f32.partialorder %v653, 8.507059e+37
      %v655 = vand.u32 %v614, 2147483648
      %v656 = vor.u32 1.1754944e-38, %v655
      %v657 = vsel %vm654, %v656, %v652
      %v658 = vmul.f32 %v598, %v657
      %v659 = vrcp.pop %v615
      %v660 = vmul.f32 %v615, %v659
      %v661 = vsub.f32 1.0, %v660
      %v662 = vmul.f32 %v659, %v661
      %v663 = vadd.f32 %v659, %v662
      %vm664 = vweird.f32 %v615
      %vm665 = vweird.f32 %v659
      %vm666 = vmor %vm664, %vm665
      %v667 = vsel %vm666, %v659, %v663
      %v668 = vand.u32 2147483647, %v615
      %vm669 = vcmp.eq.f32.partialorder %v668, 8.507059e+37
      %v670 = vand.u32 %v615, 2147483648
      %v671 = vor.u32 1.1754944e-38, %v670
      %v672 = vsel %vm669, %v671, %v667
      %v673 = vmul.f32 %v599, %v672
      %v674 = vrcp.pop %v616
      %v675 = vmul.f32 %v616, %v674
      %v676 = vsub.f32 1.0, %v675
      %v677 = vmul.f32 %v674, %v676
      %v678 = vadd.f32 %v674, %v677
      %vm679 = vweird.f32 %v616
      %vm680 = vweird.f32 %v674
      %vm681 = vmor %vm679, %vm680
      %v682 = vsel %vm681, %v674, %v678
      %v683 = vand.u32 2147483647, %v616
      %vm684 = vcmp.eq.f32.partialorder %v683, 8.507059e+37
      %v685 = vand.u32 %v616, 2147483648
      %v686 = vor.u32 1.1754944e-38, %v685
      %v687 = vsel %vm684, %v686, %v682
      %v688 = vmul.f32 %v600, %v687
      %v689 = vrcp.pop %v617
      %v690 = vmul.f32 %v617, %v689
      %v691 = vsub.f32 1.0, %v690
      %v692 = vmul.f32 %v689, %v691
      %v693 = vadd.f32 %v689, %v692
      %vm694 = vweird.f32 %v617
      %vm695 = vweird.f32 %v689
      %vm696 = vmor %vm694, %vm695
      %v697 = vsel %vm696, %v689, %v693
      %v698 = vand.u32 2147483647, %v617
      %vm699 = vcmp.eq.f32.partialorder %v698, 8.507059e+37
      %v700 = vand.u32 %v617, 2147483648
      %v701 = vor.u32 1.1754944e-38, %v700
      %v702 = vsel %vm699, %v701, %v697
      %v703 = vmul.f32 %v601, %v702
      %v704 = vrcp.pop %v618
      %v705 = vmul.f32 %v618, %v704
      %v706 = vsub.f32 1.0, %v705
      %v707 = vmul.f32 %v704, %v706
      %v708 = vadd.f32 %v704, %v707
      %vm709 = vweird.f32 %v618
      %vm710 = vweird.f32 %v704
      %vm711 = vmor %vm709, %vm710
      %v712 = vsel %vm711, %v704, %v708
      %v713 = vand.u32 2147483647, %v618
      %vm714 = vcmp.eq.f32.partialorder %v713, 8.507059e+37
      %v715 = vand.u32 %v618, 2147483648
      %v716 = vor.u32 1.1754944e-38, %v715
      %v717 = vsel %vm714, %v716, %v712
      %v718 = vmul.f32 %v602, %v717
      %v719 = vrcp.pop %v619
      %v720 = vmul.f32 %v619, %v719
      %v721 = vsub.f32 1.0, %v720
      %v722 = vmul.f32 %v719, %v721
      %v723 = vadd.f32 %v719, %v722
      %vm724 = vweird.f32 %v619
      %vm725 = vweird.f32 %v719
      %vm726 = vmor %vm724, %vm725
      %v727 = vsel %vm726, %v719, %v723
      %v728 = vand.u32 2147483647, %v619
      %vm729 = vcmp.eq.f32.partialorder %v728, 8.507059e+37
      %v730 = vand.u32 %v619, 2147483648
      %v731 = vor.u32 1.1754944e-38, %v730
      %v732 = vsel %vm729, %v731, %v727
      %v733 = vmul.f32 %v603, %v732
      %v734 = vrcp.pop %v620
      %v735 = vmul.f32 %v620, %v734
      %v736 = vsub.f32 1.0, %v735
      %v737 = vmul.f32 %v734, %v736
      %v738 = vadd.f32 %v734, %v737
      %vm739 = vweird.f32 %v620
      %vm740 = vweird.f32 %v734
      %vm741 = vmor %vm739, %vm740
      %v742 = vsel %vm741, %v734, %v738
      %v743 = vand.u32 2147483647, %v620
      %vm744 = vcmp.eq.f32.partialorder %v743, 8.507059e+37
      %v745 = vand.u32 %v620, 2147483648
      %v746 = vor.u32 1.1754944e-38, %v745
      %v747 = vsel %vm744, %v746, %v742
      %v748 = vmul.f32 %v604, %v747
      %v749 = vrcp.pop %v621
      %v750 = vmul.f32 %v621, %v749
      %v751 = vsub.f32 1.0, %v750
      %v752 = vmul.f32 %v749, %v751
      %v753 = vadd.f32 %v749, %v752
      %vm754 = vweird.f32 %v621
      %vm755 = vweird.f32 %v749
      %vm756 = vmor %vm754, %vm755
      %v757 = vsel %vm756, %v749, %v753
      %v758 = vand.u32 2147483647, %v621
      %vm759 = vcmp.eq.f32.partialorder %v758, 8.507059e+37
      %v760 = vand.u32 %v621, 2147483648
      %v761 = vor.u32 1.1754944e-38, %v760
      %v762 = vsel %vm759, %v761, %v757
      %v763 = vmul.f32 %v605, %v762
      %v764 = vrcp.pop %v622
      %v765 = vmul.f32 %v622, %v764
      %v766 = vsub.f32 1.0, %v765
      %v767 = vmul.f32 %v764, %v766
      %v768 = vadd.f32 %v764, %v767
      %vm769 = vweird.f32 %v622
      %vm770 = vweird.f32 %v764
      %vm771 = vmor %vm769, %vm770
      %v772 = vsel %vm771, %v764, %v768
      %v773 = vand.u32 2147483647, %v622
      %vm774 = vcmp.eq.f32.partialorder %v773, 8.507059e+37
      %v775 = vand.u32 %v622, 2147483648
      %v776 = vor.u32 1.1754944e-38, %v775
      %v777 = vsel %vm774, %v776, %v772
      %v778 = vmul.f32 %v606, %v777
      %v779 = vrcp.pop %v623
      %v780 = vmul.f32 %v623, %v779
      %v781 = vsub.f32 1.0, %v780
      %v782 = vmul.f32 %v779, %v781
      %v783 = vadd.f32 %v779, %v782
      %vm784 = vweird.f32 %v623
      %vm785 = vweird.f32 %v779
      %vm786 = vmor %vm784, %vm785
      %v787 = vsel %vm786, %v779, %v783
      %v788 = vand.u32 2147483647, %v623
      %vm789 = vcmp.eq.f32.partialorder %v788, 8.507059e+37
      %v790 = vand.u32 %v623, 2147483648
      %v791 = vor.u32 1.1754944e-38, %v790
      %v792 = vsel %vm789, %v791, %v787
      %v793 = vmul.f32 %v607, %v792
      %v794 = vrcp.pop %v624
      %v795 = vmul.f32 %v624, %v794
      %v796 = vsub.f32 1.0, %v795
      %v797 = vmul.f32 %v794, %v796
      %v798 = vadd.f32 %v794, %v797
      %vm799 = vweird.f32 %v624
      %vm800 = vweird.f32 %v794
      %vm801 = vmor %vm799, %vm800
      %v802 = vsel %vm801, %v794, %v798
      %v803 = vand.u32 2147483647, %v624
      %vm804 = vcmp.eq.f32.partialorder %v803, 8.507059e+37
      %v805 = vand.u32 %v624, 2147483648
      %v806 = vor.u32 1.1754944e-38, %v805
      %v807 = vsel %vm804, %v806, %v802
      %v808 = vmul.f32 %v608, %v807
      %v809 = vrcp.pop %v625
      %v810 = vmul.f32 %v625, %v809
      %v811 = vsub.f32 1.0, %v810
      %v812 = vmul.f32 %v809, %v811
      %v813 = vadd.f32 %v809, %v812
      %vm814 = vweird.f32 %v625
      %vm815 = vweird.f32 %v809
      %vm816 = vmor %vm814, %vm815
      %v817 = vsel %vm816, %v809, %v813
      %v818 = vand.u32 2147483647, %v625
      %vm819 = vcmp.eq.f32.partialorder %v818, 8.507059e+37
      %v820 = vand.u32 %v625, 2147483648
      %v821 = vor.u32 1.1754944e-38, %v820
      %v822 = vsel %vm819, %v821, %v817
      %v823 = vmul.f32 %v609, %v822
      %v824 = vrcp.pop %v626
      %v825 = vmul.f32 %v626, %v824
      %v826 = vsub.f32 1.0, %v825
      %v827 = vmul.f32 %v824, %v826
      %v828 = vadd.f32 %v824, %v827
      %vm829 = vweird.f32 %v626
      %vm830 = vweird.f32 %v824
      %vm831 = vmor %vm829, %vm830
      %v832 = vsel %vm831, %v824, %v828
      %v833 = vand.u32 2147483647, %v626
      %vm834 = vcmp.eq.f32.partialorder %v833, 8.507059e+37
      %v835 = vand.u32 %v626, 2147483648
      %v836 = vor.u32 1.1754944e-38, %v835
      %v837 = vsel %vm834, %v836, %v832
      %v838 = vmul.f32 %v610, %v837
      %v839 = vrcp.pop %v627
      %v840 = vmul.f32 %v627, %v839
      %v841 = vsub.f32 1.0, %v840
      %v842 = vmul.f32 %v839, %v841
      %v843 = vadd.f32 %v839, %v842
      %vm844 = vweird.f32 %v627
      %vm845 = vweird.f32 %v839
      %vm846 = vmor %vm844, %vm845
      %v847 = vsel %vm846, %v839, %v843
      %v848 = vand.u32 2147483647, %v627
      %vm849 = vcmp.eq.f32.partialorder %v848, 8.507059e+37
      %v850 = vand.u32 %v627, 2147483648
      %v851 = vor.u32 1.1754944e-38, %v850
      %v852 = vsel %vm849, %v851, %v847
      %v853 = vmul.f32 %v611, %v852
      %v854 = vrcp.pop %v628
      %v855 = vmul.f32 %v628, %v854
      %v856 = vsub.f32 1.0, %v855
      %v857 = vmul.f32 %v854, %v856
      %v858 = vadd.f32 %v854, %v857
      %vm859 = vweird.f32 %v628
      %vm860 = vweird.f32 %v854
      %vm861 = vmor %vm859, %vm860
      %v862 = vsel %vm861, %v854, %v858
      %v863 = vand.u32 2147483647, %v628
      %vm864 = vcmp.eq.f32.partialorder %v863, 8.507059e+37
      %v865 = vand.u32 %v628, 2147483648
      %v866 = vor.u32 1.1754944e-38, %v865
      %v867 = vsel %vm864, %v866, %v862
      %v868 = vmul.f32 %v612, %v867
      %v869 = vpack.c.bf16 %v658, %v643
      %v870 = vpack.c.bf16 %v688, %v673
      %v871 = vpack.c.bf16 %v718, %v703
      %v872 = vpack.c.bf16 %v748, %v733
      %v873 = vpack.c.bf16 %v778, %v763
      %v874 = vpack.c.bf16 %v808, %v793
      %v875 = vpack.c.bf16 %v838, %v823
      %v876 = vpack.c.bf16 %v868, %v853
      %v877 = vld [vmem:[%s4] sm:$0xf]
      %v878 = vld [vmem:[%s4 + $0x4] sm:$0xf]
      %v879 = vld [vmem:[%s4 + $0x8] sm:$0xf]
      %v880 = vld [vmem:[%s4 + $0xc] sm:$0xf]
      %v881 = vld [vmem:[%s4 + $0x10] sm:$0xf]
      %v882 = vld [vmem:[%s4 + $0x14] sm:$0xf]
      %v883 = vld [vmem:[%s4 + $0x18] sm:$0xf]
      %v884 = vld [vmem:[%s4 + $0x1c] sm:$0xf]
      %v885 = vld [vmem:[%s4 + $0x20] sm:$0xf]
      %v886 = vld [vmem:[%s4 + $0x24] sm:$0xf]
      %v887 = vld [vmem:[%s4 + $0x28] sm:$0xf]
      %v888 = vld [vmem:[%s4 + $0x2c] sm:$0xf]
      %v889 = vld [vmem:[%s4 + $0x30] sm:$0xf]
      %v890 = vld [vmem:[%s4 + $0x34] sm:$0xf]
      %v891 = vld [vmem:[%s4 + $0x38] sm:$0xf]
      %v892 = vld [vmem:[%s4 + $0x3c] sm:$0xf]
      %v893 = vld [vmem:[%s5] sm:$0x1]
      %v895 = vperm.slane %v893, 0
      %v913 = vunpack.c.l.b16 %v877
      %v914 = vunpack.c.l.b16 %v878
      %v915 = vunpack.c.l.b16 %v879
      %v916 = vunpack.c.l.b16 %v880
      %v917 = vunpack.c.l.b16 %v881
      %v918 = vunpack.c.l.b16 %v882
      %v919 = vunpack.c.l.b16 %v883
      %v920 = vunpack.c.l.b16 %v884
      %v921 = vunpack.c.l.b16 %v885
      %v922 = vunpack.c.l.b16 %v886
      %v923 = vunpack.c.l.b16 %v887
      %v924 = vunpack.c.l.b16 %v888
      %v925 = vunpack.c.l.b16 %v889
      %v926 = vunpack.c.l.b16 %v890
      %v927 = vunpack.c.l.b16 %v891
      %v928 = vunpack.c.l.b16 %v892
      %v929 = vpack.c.b16 %v914, %v913
      %v930 = vpack.c.b16 %v916, %v915
      %v931 = vpack.c.b16 %v918, %v917
      %v932 = vpack.c.b16 %v920, %v919
      %v933 = vpack.c.b16 %v922, %v921
      %v934 = vpack.c.b16 %v924, %v923
      %v935 = vpack.c.b16 %v926, %v925
      %v936 = vpack.c.b16 %v928, %v927
      %945 = vmatpush.bf16.msra.mxu0 %v936
      %946 = vmatpush.bf16.msra.mxu0 %v935
      %947 = vmatpush.bf16.msra.mxu0 %v934
      %948 = vmatpush.bf16.msra.mxu0 %v933
      %949 = vmatpush.bf16.msra.mxu0 %v932
      %950 = vmatpush.bf16.msra.mxu0 %v931
      %951 = vmatpush.bf16.msra.mxu0 %v930
      %952 = vmatpush.bf16.msra.mxu0 %v929
      %953 = vmatmul.bf16.gmra.mxu0 %v869
      %v954 = vpop.f32.mrf.mxu0
      %v955 = vadd.f32 %v895, %v954
      %v956 = vpop.f32.mrf.mxu0
      %v957 = vadd.f32 %v895, %v956
      %958 = vmatmul.bf16.gmra.mxu0 %v870
      %v959 = vpop.f32.mrf.mxu0
      %v960 = vadd.f32 %v895, %v959
      %v961 = vpop.f32.mrf.mxu0
      %v962 = vadd.f32 %v895, %v961
      %963 = vmatmul.bf16.gmra.mxu0 %v871
      %v964 = vpop.f32.mrf.mxu0
      %v965 = vadd.f32 %v895, %v964
      %v966 = vpop.f32.mrf.mxu0
      %v967 = vadd.f32 %v895, %v966
      %968 = vmatmul.bf16.gmra.mxu0 %v872
      %v969 = vpop.f32.mrf.mxu0
      %v970 = vadd.f32 %v895, %v969
      %v971 = vpop.f32.mrf.mxu0
      %v972 = vadd.f32 %v895, %v971
      %973 = vmatmul.bf16.gmra.mxu0 %v873
      %v974 = vpop.f32.mrf.mxu0
      %v975 = vadd.f32 %v895, %v974
      %v976 = vpop.f32.mrf.mxu0
      %v977 = vadd.f32 %v895, %v976
      %978 = vmatmul.bf16.gmra.mxu0 %v874
      %v979 = vpop.f32.mrf.mxu0
      %v980 = vadd.f32 %v895, %v979
      %v981 = vpop.f32.mrf.mxu0
      %v982 = vadd.f32 %v895, %v981
      %983 = vmatmul.bf16.gmra.mxu0 %v875
      %v984 = vpop.f32.mrf.mxu0
      %v985 = vadd.f32 %v895, %v984
      %v986 = vpop.f32.mrf.mxu0
      %v987 = vadd.f32 %v895, %v986
      %988 = vmatmul.bf16.gmra.mxu0 %v876
      %v989 = vpop.f32.mrf.mxu0
      %v990 = vadd.f32 %v895, %v989
      %v991 = vpop.f32.mrf.mxu0
      %v992 = vadd.f32 %v895, %v991
      %993 = vdwg.mxu0
      %v994 = vmin.f32 %v955, 20.0
      %v995 = vmin.f32 %v957, 20.0
      %v996 = vmin.f32 %v960, 20.0
      %v997 = vmin.f32 %v962, 20.0
      %v998 = vmin.f32 %v965, 20.0
      %v999 = vmin.f32 %v967, 20.0
      %v1000 = vmin.f32 %v970, 20.0
      %v1001 = vmin.f32 %v972, 20.0
      %v1002 = vmin.f32 %v975, 20.0
      %v1003 = vmin.f32 %v977, 20.0
      %v1004 = vmin.f32 %v980, 20.0
      %v1005 = vmin.f32 %v982, 20.0
      %v1006 = vmin.f32 %v985, 20.0
      %v1007 = vmin.f32 %v987, 20.0
      %v1008 = vmin.f32 %v990, 20.0
      %v1009 = vmin.f32 %v992, 20.0
      %v1010 = vmul.f32 %v994, 1.442695
      %v1011 = vpow.pop %v1010
      %v1012 = vmul.f32 %v995, 1.442695
      %v1013 = vpow.pop %v1012
      %v1014 = vmul.f32 %v996, 1.442695
      %v1015 = vpow.pop %v1014
      %v1016 = vmul.f32 %v997, 1.442695
      %v1017 = vpow.pop %v1016
      %v1018 = vmul.f32 %v998, 1.442695
      %v1019 = vpow.pop %v1018
      %v1020 = vmul.f32 %v999, 1.442695
      %v1021 = vpow.pop %v1020
      %v1022 = vmul.f32 %v1000, 1.442695
      %v1023 = vpow.pop %v1022
      %v1024 = vmul.f32 %v1001, 1.442695
      %v1025 = vpow.pop %v1024
      %v1026 = vmul.f32 %v1002, 1.442695
      %v1027 = vpow.pop %v1026
      %v1028 = vmul.f32 %v1003, 1.442695
      %v1029 = vpow.pop %v1028
      %v1030 = vmul.f32 %v1004, 1.442695
      %v1031 = vpow.pop %v1030
      %v1032 = vmul.f32 %v1005, 1.442695
      %v1033 = vpow.pop %v1032
      %v1034 = vmul.f32 %v1006, 1.442695
      %v1035 = vpow.pop %v1034
      %v1036 = vmul.f32 %v1007, 1.442695
      %v1037 = vpow.pop %v1036
      %v1038 = vmul.f32 %v1008, 1.442695
      %v1039 = vpow.pop %v1038
      %v1040 = vmul.f32 %v1009, 1.442695
      %v1041 = vpow.pop %v1040
      %v1042 = vadd.f32 %v1011, 2.0
      %v1043 = vadd.f32 %v1013, 2.0
      %v1044 = vadd.f32 %v1015, 2.0
      %v1045 = vadd.f32 %v1017, 2.0
      %v1046 = vadd.f32 %v1019, 2.0
      %v1047 = vadd.f32 %v1021, 2.0
      %v1048 = vadd.f32 %v1023, 2.0
      %v1049 = vadd.f32 %v1025, 2.0
      %v1050 = vadd.f32 %v1027, 2.0
      %v1051 = vadd.f32 %v1029, 2.0
      %v1052 = vadd.f32 %v1031, 2.0
      %v1053 = vadd.f32 %v1033, 2.0
      %v1054 = vadd.f32 %v1035, 2.0
      %v1055 = vadd.f32 %v1037, 2.0
      %v1056 = vadd.f32 %v1039, 2.0
      %v1057 = vadd.f32 %v1041, 2.0
      %v1058 = vmul.f32 %v1011, %v1042
      %v1059 = vmul.f32 %v1013, %v1043
      %v1060 = vmul.f32 %v1015, %v1044
      %v1061 = vmul.f32 %v1017, %v1045
      %v1062 = vmul.f32 %v1019, %v1046
      %v1063 = vmul.f32 %v1021, %v1047
      %v1064 = vmul.f32 %v1023, %v1048
      %v1065 = vmul.f32 %v1025, %v1049
      %v1066 = vmul.f32 %v1027, %v1050
      %v1067 = vmul.f32 %v1029, %v1051
      %v1068 = vmul.f32 %v1031, %v1052
      %v1069 = vmul.f32 %v1033, %v1053
      %v1070 = vmul.f32 %v1035, %v1054
      %v1071 = vmul.f32 %v1037, %v1055
      %v1072 = vmul.f32 %v1039, %v1056
      %v1073 = vmul.f32 %v1041, %v1057
      %v1074 = vmul.f32 %v955, %v1058
      %v1075 = vmul.f32 %v957, %v1059
      %v1076 = vmul.f32 %v960, %v1060
      %v1077 = vmul.f32 %v962, %v1061
      %v1078 = vmul.f32 %v965, %v1062
      %v1079 = vmul.f32 %v967, %v1063
      %v1080 = vmul.f32 %v970, %v1064
      %v1081 = vmul.f32 %v972, %v1065
      %v1082 = vmul.f32 %v975, %v1066
      %v1083 = vmul.f32 %v977, %v1067
      %v1084 = vmul.f32 %v980, %v1068
      %v1085 = vmul.f32 %v982, %v1069
      %v1086 = vmul.f32 %v985, %v1070
      %v1087 = vmul.f32 %v987, %v1071
      %v1088 = vmul.f32 %v990, %v1072
      %v1089 = vmul.f32 %v992, %v1073
      %v1090 = vadd.f32 %v1058, 2.0
      %v1091 = vadd.f32 %v1059, 2.0
      %v1092 = vadd.f32 %v1060, 2.0
      %v1093 = vadd.f32 %v1061, 2.0
      %v1094 = vadd.f32 %v1062, 2.0
      %v1095 = vadd.f32 %v1063, 2.0
      %v1096 = vadd.f32 %v1064, 2.0
      %v1097 = vadd.f32 %v1065, 2.0
      %v1098 = vadd.f32 %v1066, 2.0
      %v1099 = vadd.f32 %v1067, 2.0
      %v1100 = vadd.f32 %v1068, 2.0
      %v1101 = vadd.f32 %v1069, 2.0
      %v1102 = vadd.f32 %v1070, 2.0
      %v1103 = vadd.f32 %v1071, 2.0
      %v1104 = vadd.f32 %v1072, 2.0
      %v1105 = vadd.f32 %v1073, 2.0
      %v1106 = vrcp.pop %v1090
      %v1107 = vmul.f32 %v1090, %v1106
      %v1108 = vsub.f32 1.0, %v1107
      %v1109 = vmul.f32 %v1106, %v1108
      %v1110 = vadd.f32 %v1106, %v1109
      %vm1111 = vweird.f32 %v1090
      %vm1112 = vweird.f32 %v1106
      %vm1113 = vmor %vm1111, %vm1112
      %v1114 = vsel %vm1113, %v1106, %v1110
      %v1115 = vand.u32 2147483647, %v1090
      %vm1116 = vcmp.eq.f32.partialorder %v1115, 8.507059e+37
      %v1117 = vand.u32 %v1090, 2147483648
      %v1118 = vor.u32 1.1754944e-38, %v1117
      %v1119 = vsel %vm1116, %v1118, %v1114
      %v1120 = vmul.f32 %v1074, %v1119
      %v1121 = vrcp.pop %v1091
      %v1122 = vmul.f32 %v1091, %v1121
      %v1123 = vsub.f32 1.0, %v1122
      %v1124 = vmul.f32 %v1121, %v1123
      %v1125 = vadd.f32 %v1121, %v1124
      %vm1126 = vweird.f32 %v1091
      %vm1127 = vweird.f32 %v1121
      %vm1128 = vmor %vm1126, %vm1127
      %v1129 = vsel %vm1128, %v1121, %v1125
      %v1130 = vand.u32 2147483647, %v1091
      %vm1131 = vcmp.eq.f32.partialorder %v1130, 8.507059e+37
      %v1132 = vand.u32 %v1091, 2147483648
      %v1133 = vor.u32 1.1754944e-38, %v1132
      %v1134 = vsel %vm1131, %v1133, %v1129
      %v1135 = vmul.f32 %v1075, %v1134
      %v1136 = vrcp.pop %v1092
      %v1137 = vmul.f32 %v1092, %v1136
      %v1138 = vsub.f32 1.0, %v1137
      %v1139 = vmul.f32 %v1136, %v1138
      %v1140 = vadd.f32 %v1136, %v1139
      %vm1141 = vweird.f32 %v1092
      %vm1142 = vweird.f32 %v1136
      %vm1143 = vmor %vm1141, %vm1142
      %v1144 = vsel %vm1143, %v1136, %v1140
      %v1145 = vand.u32 2147483647, %v1092
      %vm1146 = vcmp.eq.f32.partialorder %v1145, 8.507059e+37
      %v1147 = vand.u32 %v1092, 2147483648
      %v1148 = vor.u32 1.1754944e-38, %v1147
      %v1149 = vsel %vm1146, %v1148, %v1144
      %v1150 = vmul.f32 %v1076, %v1149
      %v1151 = vrcp.pop %v1093
      %v1152 = vmul.f32 %v1093, %v1151
      %v1153 = vsub.f32 1.0, %v1152
      %v1154 = vmul.f32 %v1151, %v1153
      %v1155 = vadd.f32 %v1151, %v1154
      %vm1156 = vweird.f32 %v1093
      %vm1157 = vweird.f32 %v1151
      %vm1158 = vmor %vm1156, %vm1157
      %v1159 = vsel %vm1158, %v1151, %v1155
      %v1160 = vand.u32 2147483647, %v1093
      %vm1161 = vcmp.eq.f32.partialorder %v1160, 8.507059e+37
      %v1162 = vand.u32 %v1093, 2147483648
      %v1163 = vor.u32 1.1754944e-38, %v1162
      %v1164 = vsel %vm1161, %v1163, %v1159
      %v1165 = vmul.f32 %v1077, %v1164
      %v1166 = vrcp.pop %v1094
      %v1167 = vmul.f32 %v1094, %v1166
      %v1168 = vsub.f32 1.0, %v1167
      %v1169 = vmul.f32 %v1166, %v1168
      %v1170 = vadd.f32 %v1166, %v1169
      %vm1171 = vweird.f32 %v1094
      %vm1172 = vweird.f32 %v1166
      %vm1173 = vmor %vm1171, %vm1172
      %v1174 = vsel %vm1173, %v1166, %v1170
      %v1175 = vand.u32 2147483647, %v1094
      %vm1176 = vcmp.eq.f32.partialorder %v1175, 8.507059e+37
      %v1177 = vand.u32 %v1094, 2147483648
      %v1178 = vor.u32 1.1754944e-38, %v1177
      %v1179 = vsel %vm1176, %v1178, %v1174
      %v1180 = vmul.f32 %v1078, %v1179
      %v1181 = vrcp.pop %v1095
      %v1182 = vmul.f32 %v1095, %v1181
      %v1183 = vsub.f32 1.0, %v1182
      %v1184 = vmul.f32 %v1181, %v1183
      %v1185 = vadd.f32 %v1181, %v1184
      %vm1186 = vweird.f32 %v1095
      %vm1187 = vweird.f32 %v1181
      %vm1188 = vmor %vm1186, %vm1187
      %v1189 = vsel %vm1188, %v1181, %v1185
      %v1190 = vand.u32 2147483647, %v1095
      %vm1191 = vcmp.eq.f32.partialorder %v1190, 8.507059e+37
      %v1192 = vand.u32 %v1095, 2147483648
      %v1193 = vor.u32 1.1754944e-38, %v1192
      %v1194 = vsel %vm1191, %v1193, %v1189
      %v1195 = vmul.f32 %v1079, %v1194
      %v1196 = vrcp.pop %v1096
      %v1197 = vmul.f32 %v1096, %v1196
      %v1198 = vsub.f32 1.0, %v1197
      %v1199 = vmul.f32 %v1196, %v1198
      %v1200 = vadd.f32 %v1196, %v1199
      %vm1201 = vweird.f32 %v1096
      %vm1202 = vweird.f32 %v1196
      %vm1203 = vmor %vm1201, %vm1202
      %v1204 = vsel %vm1203, %v1196, %v1200
      %v1205 = vand.u32 2147483647, %v1096
      %vm1206 = vcmp.eq.f32.partialorder %v1205, 8.507059e+37
      %v1207 = vand.u32 %v1096, 2147483648
      %v1208 = vor.u32 1.1754944e-38, %v1207
      %v1209 = vsel %vm1206, %v1208, %v1204
      %v1210 = vmul.f32 %v1080, %v1209
      %v1211 = vrcp.pop %v1097
      %v1212 = vmul.f32 %v1097, %v1211
      %v1213 = vsub.f32 1.0, %v1212
      %v1214 = vmul.f32 %v1211, %v1213
      %v1215 = vadd.f32 %v1211, %v1214
      %vm1216 = vweird.f32 %v1097
      %vm1217 = vweird.f32 %v1211
      %vm1218 = vmor %vm1216, %vm1217
      %v1219 = vsel %vm1218, %v1211, %v1215
      %v1220 = vand.u32 2147483647, %v1097
      %vm1221 = vcmp.eq.f32.partialorder %v1220, 8.507059e+37
      %v1222 = vand.u32 %v1097, 2147483648
      %v1223 = vor.u32 1.1754944e-38, %v1222
      %v1224 = vsel %vm1221, %v1223, %v1219
      %v1225 = vmul.f32 %v1081, %v1224
      %v1226 = vrcp.pop %v1098
      %v1227 = vmul.f32 %v1098, %v1226
      %v1228 = vsub.f32 1.0, %v1227
      %v1229 = vmul.f32 %v1226, %v1228
      %v1230 = vadd.f32 %v1226, %v1229
      %vm1231 = vweird.f32 %v1098
      %vm1232 = vweird.f32 %v1226
      %vm1233 = vmor %vm1231, %vm1232
      %v1234 = vsel %vm1233, %v1226, %v1230
      %v1235 = vand.u32 2147483647, %v1098
      %vm1236 = vcmp.eq.f32.partialorder %v1235, 8.507059e+37
      %v1237 = vand.u32 %v1098, 2147483648
      %v1238 = vor.u32 1.1754944e-38, %v1237
      %v1239 = vsel %vm1236, %v1238, %v1234
      %v1240 = vmul.f32 %v1082, %v1239
      %v1241 = vrcp.pop %v1099
      %v1242 = vmul.f32 %v1099, %v1241
      %v1243 = vsub.f32 1.0, %v1242
      %v1244 = vmul.f32 %v1241, %v1243
      %v1245 = vadd.f32 %v1241, %v1244
      %vm1246 = vweird.f32 %v1099
      %vm1247 = vweird.f32 %v1241
      %vm1248 = vmor %vm1246, %vm1247
      %v1249 = vsel %vm1248, %v1241, %v1245
      %v1250 = vand.u32 2147483647, %v1099
      %vm1251 = vcmp.eq.f32.partialorder %v1250, 8.507059e+37
      %v1252 = vand.u32 %v1099, 2147483648
      %v1253 = vor.u32 1.1754944e-38, %v1252
      %v1254 = vsel %vm1251, %v1253, %v1249
      %v1255 = vmul.f32 %v1083, %v1254
      %v1256 = vrcp.pop %v1100
      %v1257 = vmul.f32 %v1100, %v1256
      %v1258 = vsub.f32 1.0, %v1257
      %v1259 = vmul.f32 %v1256, %v1258
      %v1260 = vadd.f32 %v1256, %v1259
      %vm1261 = vweird.f32 %v1100
      %vm1262 = vweird.f32 %v1256
      %vm1263 = vmor %vm1261, %vm1262
      %v1264 = vsel %vm1263, %v1256, %v1260
      %v1265 = vand.u32 2147483647, %v1100
      %vm1266 = vcmp.eq.f32.partialorder %v1265, 8.507059e+37
      %v1267 = vand.u32 %v1100, 2147483648
      %v1268 = vor.u32 1.1754944e-38, %v1267
      %v1269 = vsel %vm1266, %v1268, %v1264
      %v1270 = vmul.f32 %v1084, %v1269
      %v1271 = vrcp.pop %v1101
      %v1272 = vmul.f32 %v1101, %v1271
      %v1273 = vsub.f32 1.0, %v1272
      %v1274 = vmul.f32 %v1271, %v1273
      %v1275 = vadd.f32 %v1271, %v1274
      %vm1276 = vweird.f32 %v1101
      %vm1277 = vweird.f32 %v1271
      %vm1278 = vmor %vm1276, %vm1277
      %v1279 = vsel %vm1278, %v1271, %v1275
      %v1280 = vand.u32 2147483647, %v1101
      %vm1281 = vcmp.eq.f32.partialorder %v1280, 8.507059e+37
      %v1282 = vand.u32 %v1101, 2147483648
      %v1283 = vor.u32 1.1754944e-38, %v1282
      %v1284 = vsel %vm1281, %v1283, %v1279
      %v1285 = vmul.f32 %v1085, %v1284
      %v1286 = vrcp.pop %v1102
      %v1287 = vmul.f32 %v1102, %v1286
      %v1288 = vsub.f32 1.0, %v1287
      %v1289 = vmul.f32 %v1286, %v1288
      %v1290 = vadd.f32 %v1286, %v1289
      %vm1291 = vweird.f32 %v1102
      %vm1292 = vweird.f32 %v1286
      %vm1293 = vmor %vm1291, %vm1292
      %v1294 = vsel %vm1293, %v1286, %v1290
      %v1295 = vand.u32 2147483647, %v1102
      %vm1296 = vcmp.eq.f32.partialorder %v1295, 8.507059e+37
      %v1297 = vand.u32 %v1102, 2147483648
      %v1298 = vor.u32 1.1754944e-38, %v1297
      %v1299 = vsel %vm1296, %v1298, %v1294
      %v1300 = vmul.f32 %v1086, %v1299
      %v1301 = vrcp.pop %v1103
      %v1302 = vmul.f32 %v1103, %v1301
      %v1303 = vsub.f32 1.0, %v1302
      %v1304 = vmul.f32 %v1301, %v1303
      %v1305 = vadd.f32 %v1301, %v1304
      %vm1306 = vweird.f32 %v1103
      %vm1307 = vweird.f32 %v1301
      %vm1308 = vmor %vm1306, %vm1307
      %v1309 = vsel %vm1308, %v1301, %v1305
      %v1310 = vand.u32 2147483647, %v1103
      %vm1311 = vcmp.eq.f32.partialorder %v1310, 8.507059e+37
      %v1312 = vand.u32 %v1103, 2147483648
      %v1313 = vor.u32 1.1754944e-38, %v1312
      %v1314 = vsel %vm1311, %v1313, %v1309
      %v1315 = vmul.f32 %v1087, %v1314
      %v1316 = vrcp.pop %v1104
      %v1317 = vmul.f32 %v1104, %v1316
      %v1318 = vsub.f32 1.0, %v1317
      %v1319 = vmul.f32 %v1316, %v1318
      %v1320 = vadd.f32 %v1316, %v1319
      %vm1321 = vweird.f32 %v1104
      %vm1322 = vweird.f32 %v1316
      %vm1323 = vmor %vm1321, %vm1322
      %v1324 = vsel %vm1323, %v1316, %v1320
      %v1325 = vand.u32 2147483647, %v1104
      %vm1326 = vcmp.eq.f32.partialorder %v1325, 8.507059e+37
      %v1327 = vand.u32 %v1104, 2147483648
      %v1328 = vor.u32 1.1754944e-38, %v1327
      %v1329 = vsel %vm1326, %v1328, %v1324
      %v1330 = vmul.f32 %v1088, %v1329
      %v1331 = vrcp.pop %v1105
      %v1332 = vmul.f32 %v1105, %v1331
      %v1333 = vsub.f32 1.0, %v1332
      %v1334 = vmul.f32 %v1331, %v1333
      %v1335 = vadd.f32 %v1331, %v1334
      %vm1336 = vweird.f32 %v1105
      %vm1337 = vweird.f32 %v1331
      %vm1338 = vmor %vm1336, %vm1337
      %v1339 = vsel %vm1338, %v1331, %v1335
      %v1340 = vand.u32 2147483647, %v1105
      %vm1341 = vcmp.eq.f32.partialorder %v1340, 8.507059e+37
      %v1342 = vand.u32 %v1105, 2147483648
      %v1343 = vor.u32 1.1754944e-38, %v1342
      %v1344 = vsel %vm1341, %v1343, %v1339
      %v1345 = vmul.f32 %v1089, %v1344
      %v1346 = vld [vmem:[%s6] sm:$0x1]
      %v1348 = vperm.slane %v1346, 0
      %v1350 = vmul.f32 %v1120, %v1348
      %v1351 = vmul.f32 %v1135, %v1348
      %v1352 = vmul.f32 %v1150, %v1348
      %v1353 = vmul.f32 %v1165, %v1348
      %v1354 = vmul.f32 %v1180, %v1348
      %v1355 = vmul.f32 %v1195, %v1348
      %v1356 = vmul.f32 %v1210, %v1348
      %v1357 = vmul.f32 %v1225, %v1348
      %v1358 = vmul.f32 %v1240, %v1348
      %v1359 = vmul.f32 %v1255, %v1348
      %v1360 = vmul.f32 %v1270, %v1348
      %v1361 = vmul.f32 %v1285, %v1348
      %v1362 = vmul.f32 %v1300, %v1348
      %v1363 = vmul.f32 %v1315, %v1348
      %v1364 = vmul.f32 %v1330, %v1348
      %v1365 = vmul.f32 %v1345, %v1348
      %1366 = vadd.xlane.f32.xlu0 %v1350
      %v1367 = vpop.xlane.xlu0 %1366
      %1368 = vadd.xlane.f32.xlu0 %v1351
      %v1369 = vpop.xlane.xlu0 %1368
      %1370 = vadd.xlane.f32.xlu0 %v1352
      %v1371 = vpop.xlane.xlu0 %1370
      %1372 = vadd.xlane.f32.xlu0 %v1353
      %v1373 = vpop.xlane.xlu0 %1372
      %1374 = vadd.xlane.f32.xlu0 %v1354
      %v1375 = vpop.xlane.xlu0 %1374
      %1376 = vadd.xlane.f32.xlu0 %v1355
      %v1377 = vpop.xlane.xlu0 %1376
      %1378 = vadd.xlane.f32.xlu0 %v1356
      %v1379 = vpop.xlane.xlu0 %1378
      %1380 = vadd.xlane.f32.xlu0 %v1357
      %v1381 = vpop.xlane.xlu0 %1380
      %1382 = vadd.xlane.f32.xlu0 %v1358
      %v1383 = vpop.xlane.xlu0 %1382
      %1384 = vadd.xlane.f32.xlu0 %v1359
      %v1385 = vpop.xlane.xlu0 %1384
      %1386 = vadd.xlane.f32.xlu0 %v1360
      %v1387 = vpop.xlane.xlu0 %1386
      %1388 = vadd.xlane.f32.xlu0 %v1361
      %v1389 = vpop.xlane.xlu0 %1388
      %1390 = vadd.xlane.f32.xlu0 %v1362
      %v1391 = vpop.xlane.xlu0 %1390
      %1392 = vadd.xlane.f32.xlu0 %v1363
      %v1393 = vpop.xlane.xlu0 %1392
      %1394 = vadd.xlane.f32.xlu0 %v1364
      %v1395 = vpop.xlane.xlu0 %1394
      %1396 = vadd.xlane.f32.xlu0 %v1365
      %v1397 = vpop.xlane.xlu0 %1396
      %v1398 = vld [vmem:[#allocation4] sm:$0x1]
      %v1400 = vperm.slane %v1398, 0
      %v1402 = vadd.f32 %v1367, %v1400
      %v1403 = vadd.f32 %v1369, %v1400
      %v1404 = vadd.f32 %v1371, %v1400
      %v1405 = vadd.f32 %v1373, %v1400
      %v1406 = vadd.f32 %v1375, %v1400
      %v1407 = vadd.f32 %v1377, %v1400
      %v1408 = vadd.f32 %v1379, %v1400
      %v1409 = vadd.f32 %v1381, %v1400
      %v1410 = vadd.f32 %v1383, %v1400
      %v1411 = vadd.f32 %v1385, %v1400
      %v1412 = vadd.f32 %v1387, %v1400
      %v1413 = vadd.f32 %v1389, %v1400
      %v1414 = vadd.f32 %v1391, %v1400
      %v1415 = vadd.f32 %v1393, %v1400
      %v1416 = vadd.f32 %v1395, %v1400
      %v1417 = vadd.f32 %v1397, %v1400
      %vm1418 = vcmask 7168
      %1419 = vst.msk [vmem:[%s284] sm:$0xff] %vm1418, %v1402
      %1420 = vst.msk [vmem:[%s284 + $0x8] sm:$0xff] %vm1418, %v1403
      %1421 = vst.msk [vmem:[%s284 + $0x10] sm:$0xff] %vm1418, %v1404
      %1422 = vst.msk [vmem:[%s284 + $0x18] sm:$0xff] %vm1418, %v1405
      %1423 = vst.msk [vmem:[%s284 + $0x20] sm:$0xff] %vm1418, %v1406
      %1424 = vst.msk [vmem:[%s284 + $0x28] sm:$0xff] %vm1418, %v1407
      %1425 = vst.msk [vmem:[%s284 + $0x30] sm:$0xff] %vm1418, %v1408
      %1426 = vst.msk [vmem:[%s284 + $0x38] sm:$0xff] %vm1418, %v1409
      %1427 = vst.msk [vmem:[%s284 + $0x40] sm:$0xff] %vm1418, %v1410
      %1428 = vst.msk [vmem:[%s284 + $0x48] sm:$0xff] %vm1418, %v1411
      %1429 = vst.msk [vmem:[%s284 + $0x50] sm:$0xff] %vm1418, %v1412
      %1430 = vst.msk [vmem:[%s284 + $0x58] sm:$0xff] %vm1418, %v1413
      %1431 = vst.msk [vmem:[%s284 + $0x60] sm:$0xff] %vm1418, %v1414
      %1432 = vst.msk [vmem:[%s284 + $0x68] sm:$0xff] %vm1418, %v1415
      %1433 = vst.msk [vmem:[%s284 + $0x70] sm:$0xff] %vm1418, %v1416
      %1434 = vst.msk [vmem:[%s284 + $0x78] sm:$0xff] %vm1418, %v1417
      %s1435 = smul.u32 16, %s22
      %p1436 = scmp.lt.s32.totalorder %s1435, 31
      %s1437 = scalar_select %p1436, %s1435, 31
      %s1438 = smul.addr %s1437, 8
      %s1439 = scalar_lea.vmem %s8, %s1438
      // Predicated region
      $region49: #{tpu_custom_call.1} parent=47 // pred_check
        %p1440 = pneg %p192
      $region50: #{tpu_custom_call.1} parent=47 // pred_check_branch
        %1442 = sbr.rel (%p1440) target = $region52
      $region51: #{tpu_custom_call.1} parent=47 // pred_region
        %s1443 = smul.u32 16, %s22
      $region52: #{tpu_custom_call.1} parent=47 // pred_fallthru
        _
    $region48: #{tpu_custom_call.1} parent=5 // pred_fallthru
      _
    %p1444 = scmp.le.s32.totalorder 2, %s17
    // Predicated region
    $region53: #{tpu_custom_call.1} parent=5 // pred_check
      %p1445 = pneg %p1444
    $region54: #{tpu_custom_call.1} parent=5 // pred_check_branch
      %1447 = sbr.rel (%p1445) target = $region56
    $region55: #{tpu_custom_call.1} parent=5 // pred_region
      %s1448 = ssub.s32 %s17, 2
      // Predicated region
      $region57: #{tpu_custom_call.1} parent=55 // pred_check
        %p1449 = pneg %p198
      $region58: #{tpu_custom_call.1} parent=55 // pred_check_branch
        %1451 = sbr.rel (%p1449) target = $region60
      $region59: #{tpu_custom_call.1} parent=55 // pred_region
        %s1452 = smul.u32 16, %s23
        %p1453 = scmp.lt.s32.totalorder %s1452, 31
        %s1454 = scalar_select %p1453, %s1452, 31
        %s1455 = smul.addr %s1454, 8
        %s1456 = scalar_lea.vmem %s8, %s1455
      $region60: #{tpu_custom_call.1} parent=55 // pred_fallthru
        _
    $region56: #{tpu_custom_call.1} parent=5 // pred_fallthru
      _
  $region6: #{tpu_custom_call.1} parent=0 // loop_footer
    %s21 = sadd.s32 1, %s17
  $region7: #{tpu_custom_call.1} parent=0 // loop_footer_branch
    %16 = sbr.rel target = $region3
  $region8: #{tpu_custom_call.1} parent=0 // loop_exit
    _

</llo_original>
